<compile_context>
chip_gen: v7x
topology: tpu7x:2x2x1
jax: 0.10.0
libtpu: 0.0.40
codegen_flags: <defaults>
</compile_context>

<pallas_src>
import functools

import jax
import jax.numpy as jnp
from jax import lax
from jax.experimental import pallas as pl
from jax.experimental.pallas import tpu as pltpu


# ---------------------------------------------------------------------------
# Fused TextCNN kernel
# ---------------------------------------------------------------------------
def _textcnn_fused_kernel(ids_ref, table_ref, wconv_ref, bconv_ref,
                          wfc_ref, bfc_ref, out_ref, *,
                          kernel_list, filter_num, seq_len, neg_slope):
    # ids_ref:   (tb*S, 1) int32     table_ref: (V, E)
    # wconv_ref: (k_max*E, nB*F)     bconv_ref: (1, nB*F)
    # wfc_ref:   (nB*F, O)           bfc_ref:   (1, O)
    # out_ref:   (tb, O)
    BS = ids_ref.shape[0]
    S = seq_len
    tb = BS // S
    V, E = table_ref.shape
    k_max = max(kernel_list)
    Fn = filter_num
    NF = wconv_ref.shape[1]

    # 1) Embedding lookup as a one-hot matmul gather (single MXU pass).
    ids = ids_ref[...]                                               # (tb*S, 1)
    vocab_iota = lax.broadcasted_iota(jnp.int32, (BS, V), 1)
    onehot = (ids == vocab_iota).astype(table_ref.dtype)             # (tb*S, V)
    emb = jnp.dot(onehot, table_ref[...],
                  preferred_element_type=jnp.float32)                # (tb*S, E)
    emb = emb.reshape(tb, S, E)

    # 2) Zero-pad the sequence by k_max-1 rows and build the im2col slab.
    if k_max > 1:
        emb_pad = jnp.concatenate(
            [emb, jnp.zeros((tb, k_max - 1, E), emb.dtype)], axis=1)  # (tb, S+k_max-1, E)
    else:
        emb_pad = emb
    cols = [emb_pad[:, i:i + S, :] for i in range(k_max)]             # k_max x (tb, S, E)
    im2col = jnp.concatenate(cols, axis=-1).reshape(BS, k_max * E)    # (tb*S, k_max*E)

    # 3) One MXU matmul covers every tap of every branch (K=k_max*E, N=nB*F).
    acc = jnp.dot(im2col, wconv_ref[...],
                  preferred_element_type=jnp.float32)                 # (tb*S, NF)
    acc = acc.reshape(tb, S, NF)

    # 4) Additive -inf mask for tail positions that fall off the real sequence
    #    (branch with kernel k is only valid for t in [0, S-k]), then max over
    #    time, THEN bias + LeakyReLU (monotone, so it commutes with the max).
    mask_cols = []
    for k in kernel_list:
        t_idx = lax.broadcasted_iota(jnp.int32, (S, Fn), 0)
        mask_cols.append(
            jnp.where(t_idx <= (S - k), 0.0, -jnp.inf).astype(jnp.float32))
    maskval = jnp.concatenate(mask_cols, axis=1)                      # (S, NF)
    pooled = jnp.max(acc + maskval[None, :, :], axis=1)               # (tb, NF)
    feats = pooled + bconv_ref[...]                                   # conv bias
    feats = jnp.where(feats >= 0, feats, neg_slope * feats)           # LeakyReLU(0.01)

    # 5) Dropout is identity in eval mode; final FC (matmul + bias).
    # TODO(synk): training-mode dropout (p=0.5) not implemented.
    out_ref[...] = (jnp.dot(feats, wfc_ref[...],
                            preferred_element_type=jnp.float32)
                    + bfc_ref[...]).astype(out_ref.dtype)


def textcnn_forward(token_ids, packed, kernel_list, filter_num, *, batch_tile=None):
    B, S = token_ids.shape
    V, E = packed["embedding"].shape
    k_max = max(kernel_list)
    NF = filter_num * len(kernel_list)
    O = packed["fc_b"].shape[-1]
    assert S >= k_max
    tb = B if batch_tile is None else batch_tile
    assert B % tb == 0

    ids2d = token_ids.astype(jnp.int32).reshape(B * S, 1)
    kernel = functools.partial(
        _textcnn_fused_kernel, kernel_list=tuple(kernel_list),
        filter_num=filter_num, seq_len=S, neg_slope=0.01)

    return pl.pallas_call(
        kernel,
        out_shape=jax.ShapeDtypeStruct((B, O), jnp.float32),
        grid_spec=pl.GridSpec(
            grid=(B // tb,),
            in_specs=[
                pl.BlockSpec((tb * S, 1), lambda i: (i, 0)),        # token ids
                pl.BlockSpec((V, E), lambda i: (0, 0)),             # embedding table
                pl.BlockSpec((k_max * E, NF), lambda i: (0, 0)),    # packed conv W
                pl.BlockSpec((1, NF), lambda i: (0, 0)),            # packed conv b
                pl.BlockSpec((NF, O), lambda i: (0, 0)),            # fc W (D, O)
                pl.BlockSpec((1, O), lambda i: (0, 0)),             # fc b
            ],
            out_specs=pl.BlockSpec((tb, O), lambda i: (i, 0)),
        ),
        compiler_params=pltpu.CompilerParams(
            dimension_semantics=("parallel",)),   # batch axis -> both TCs on v7x
    )(ids2d, packed["embedding"], packed["conv_w"], packed["conv_b"],
      packed["fc_w"], packed["fc_b"])


# ---------------------------------------------------------------------------
# Parameter init (PyTorch layouts) and packing into the kernel layout
# ---------------------------------------------------------------------------
def init_torch_params(key, vocab_size, embedding_dim, output_size,
                      filter_num, kernel_list):
    keys = jax.random.split(key, 2 * len(kernel_list) + 3)
    raw = {"embedding": jax.random.normal(
        keys[0], (vocab_size, embedding_dim), jnp.float32) * 0.1}
    for idx, k in enumerate(kernel_list):
        raw[f"conv{k}_w"] = jax.random.normal(
            keys[1 + 2 * idx], (filter_num, 1, k, embedding_dim), jnp.float32) * 0.1
        raw[f"conv{k}_b"] = jax.random.normal(
            keys[2 + 2 * idx], (filter_num,), jnp.float32) * 0.1
    D = filter_num * len(kernel_list)
    raw["fc_w"] = jax.random.normal(keys[-2], (output_size, D), jnp.float32) * 0.1
    raw["fc_b"] = jax.random.normal(keys[-1], (output_size,), jnp.float32) * 0.1
    return raw


def pack_params(raw, kernel_list, filter_num):
    k_max = max(kernel_list)
    E = raw["embedding"].shape[1]
    w_cols, b_cols = [], []
    for k in kernel_list:
        w = jnp.transpose(raw[f"conv{k}_w"][:, 0], (1, 2, 0))        # (k, E, F)
        w = jnp.pad(w, ((0, k_max - k), (0, 0), (0, 0)))             # zero taps >= k
        w_cols.append(w.reshape(k_max * E, filter_num))
        b_cols.append(raw[f"conv{k}_b"])
    return {
        "embedding": raw["embedding"],
        "conv_w": jnp.concatenate(w_cols, axis=1),                   # (k_max*E, nB*F)
        "conv_b": jnp.concatenate(b_cols)[None, :],                  # (1, nB*F)
        "fc_w": raw["fc_w"].T,                                       # (nB*F, O)
        "fc_b": raw["fc_b"][None, :],                                # (1, O)
    }


# Pure-JAX reference mirroring the PyTorch module (for a sanity check).
def reference_forward(token_ids, raw, kernel_list):
    emb = jnp.take(raw["embedding"], token_ids, axis=0)              # (B, S, E)
    B, S, _ = emb.shape
    feats = []
    for k in kernel_list:
        w, b = raw[f"conv{k}_w"], raw[f"conv{k}_b"]                  # (F,1,k,E), (F,)
        T = S - k + 1
        acc = jnp.zeros((B, T, w.shape[0]), jnp.float32)
        for i in range(k):
            acc = acc + jnp.einsum("bte,fe->btf", emb[:, i:i + T, :], w[:, 0, i, :])
        acc = acc + b[None, None, :]
        acc = jnp.where(acc >= 0, acc, 0.01 * acc)                   # LeakyReLU
        feats.append(jnp.max(acc, axis=1))                           # max over time
    x = jnp.concatenate(feats, axis=1)                               # eval dropout = id
    return x @ raw["fc_w"].T + raw["fc_b"][None, :]


if __name__ == "__main__":
    B, S = 4, 16                # batch, LARGE_SENTENCE_SIZE
    vocab_size, embedding_dim = 50, 32
    output_size, filter_num = 8, 16
    kernel_list = (3, 4, 5)

    key = jax.random.PRNGKey(0)
    k_ids, k_par = jax.random.split(key)
    token_ids = jax.random.randint(k_ids, (B, S), 0, vocab_size, dtype=jnp.int32)
    raw = init_torch_params(k_par, vocab_size, embedding_dim, output_size,
                            filter_num, kernel_list)
    packed = pack_params(raw, kernel_list, filter_num)

    logits = textcnn_forward(token_ids, packed, kernel_list, filter_num)
    jax.block_until_ready(logits)
    assert logits.shape == (B, output_size)

    ref = reference_forward(token_ids, raw, kernel_list)
    err = float(jnp.max(jnp.abs(logits - ref)))
    assert err < 5e-2, f"kernel output mismatch vs reference (max abs err {err})"
    print("KERNEL_OK")
</pallas_src>

<mosaic_0001>
module attributes {stable_mosaic.version = 11 : i64} {
  func.func @_textcnn_fused_kernel(%arg0: i32, %arg1: memref<64x1xi32, #tpu.memory_space<vmem>>, %arg2: memref<50x32xf32, #tpu.memory_space<vmem>>, %arg3: memref<160x48xf32, #tpu.memory_space<vmem>>, %arg4: memref<1x48xf32, #tpu.memory_space<vmem>>, %arg5: memref<48x8xf32, #tpu.memory_space<vmem>>, %arg6: memref<1x8xf32, #tpu.memory_space<vmem>>, %arg7: memref<4x8xf32, #tpu.memory_space<vmem>>) attributes {dimension_semantics = [#tpu.dimension_semantics<parallel>], iteration_bounds = array<i64: 1>, scalar_prefetch = 0 : i64, scratch_operands = 0 : i64, tpu.core_type = #tpu.core_type<tc>, window_params = [{transform_indices = @transform_0, window_bounds = array<i64: 64, 1>}, {pipeline_mode = #tpu.pipeline_mode<synchronous>, transform_indices = @transform_1, window_bounds = array<i64: 50, 32>}, {pipeline_mode = #tpu.pipeline_mode<synchronous>, transform_indices = @transform_2, window_bounds = array<i64: 160, 48>}, {pipeline_mode = #tpu.pipeline_mode<synchronous>, transform_indices = @transform_3, window_bounds = array<i64: 1, 48>}, {pipeline_mode = #tpu.pipeline_mode<synchronous>, transform_indices = @transform_4, window_bounds = array<i64: 48, 8>}, {pipeline_mode = #tpu.pipeline_mode<synchronous>, transform_indices = @transform_5, window_bounds = array<i64: 1, 8>}, {transform_indices = @transform_6, window_bounds = array<i64: 4, 8>}]} {
    %c0 = arith.constant 0 : index
    %c0_0 = arith.constant 0 : index
    %0 = vector.load %arg1[%c0, %c0_0] : memref<64x1xi32, #tpu.memory_space<vmem>>, vector<64x1xi32>
    %1 = tpu.iota {dimensions = array<i32: 1>} : vector<64x50xi32>
    %2 = vector.broadcast %0 : vector<64x1xi32> to vector<64x50xi32>
    %3 = arith.cmpi eq, %2, %1 : vector<64x50xi32>
    %4 = arith.extui %3 : vector<64x50xi1> to vector<64x50xi32>
    %5 = arith.sitofp %4 : vector<64x50xi32> to vector<64x50xf32>
    %c0_1 = arith.constant 0 : index
    %c0_2 = arith.constant 0 : index
    %6 = vector.load %arg2[%c0_1, %c0_2] : memref<50x32xf32, #tpu.memory_space<vmem>>, vector<50x32xf32>
    %cst = arith.constant dense<0.000000e+00> : vector<64x32xf32>
    %7 = tpu.matmul %5, %6, %cst {dimension_numbers = #tpu.dot_dimension_numbers<[1], [0], [0], [1], [0, 0, 1, 1], [], []>} : vector<64x50xf32>, vector<50x32xf32>, vector<64x32xf32> -> vector<64x32xf32>
    %8 = vector.shape_cast %7 : vector<64x32xf32> to vector<4x16x32xf32>
    %cst_3 = arith.constant 0.000000e+00 : f32
    %9 = vector.broadcast %cst_3 : f32 to vector<4x4x32xf32>
    %10 = tpu.concatenate %8, %9 in 1 : vector<4x16x32xf32>, vector<4x4x32xf32> -> vector<4x20x32xf32>
    %11 = vector.extract_strided_slice %10 {offsets = [0, 0, 0], sizes = [4, 16, 32], strides = [1, 1, 1]} : vector<4x20x32xf32> to vector<4x16x32xf32>
    %12 = vector.extract_strided_slice %10 {offsets = [0, 1, 0], sizes = [4, 16, 32], strides = [1, 1, 1]} : vector<4x20x32xf32> to vector<4x16x32xf32>
    %13 = vector.extract_strided_slice %10 {offsets = [0, 2, 0], sizes = [4, 16, 32], strides = [1, 1, 1]} : vector<4x20x32xf32> to vector<4x16x32xf32>
    %14 = vector.extract_strided_slice %10 {offsets = [0, 3, 0], sizes = [4, 16, 32], strides = [1, 1, 1]} : vector<4x20x32xf32> to vector<4x16x32xf32>
    %15 = vector.extract_strided_slice %10 {offsets = [0, 4, 0], sizes = [4, 16, 32], strides = [1, 1, 1]} : vector<4x20x32xf32> to vector<4x16x32xf32>
    %16 = tpu.concatenate %11, %12, %13, %14, %15 in 2 : vector<4x16x32xf32>, vector<4x16x32xf32>, vector<4x16x32xf32>, vector<4x16x32xf32>, vector<4x16x32xf32> -> vector<4x16x160xf32>
    %17 = vector.shape_cast %16 : vector<4x16x160xf32> to vector<64x160xf32>
    %c0_4 = arith.constant 0 : index
    %c0_5 = arith.constant 0 : index
    %18 = vector.load %arg3[%c0_4, %c0_5] : memref<160x48xf32, #tpu.memory_space<vmem>>, vector<160x48xf32>
    %cst_6 = arith.constant dense<0.000000e+00> : vector<64x48xf32>
    %19 = tpu.matmul %17, %18, %cst_6 {dimension_numbers = #tpu.dot_dimension_numbers<[1], [0], [0], [1], [0, 0, 1, 1], [], []>} : vector<64x160xf32>, vector<160x48xf32>, vector<64x48xf32> -> vector<64x48xf32>
    %20 = vector.shape_cast %19 : vector<64x48xf32> to vector<4x16x48xf32>
    %21 = tpu.iota {dimensions = array<i32: 0>} : vector<16x16xi32>
    %c13_i32 = arith.constant 13 : i32
    %22 = vector.broadcast %c13_i32 : i32 to vector<16x16xi32>
    %23 = arith.cmpi sle, %21, %22 : vector<16x16xi32>
    %cst_7 = arith.constant 0.000000e+00 : f32
    %cst_8 = arith.constant 0xFF800000 : f32
    %24 = vector.broadcast %cst_7 : f32 to vector<16x16xf32>
    %25 = vector.broadcast %cst_8 : f32 to vector<16x16xf32>
    %26 = arith.select %23, %24, %25 : vector<16x16xi1>, vector<16x16xf32>
    %27 = tpu.iota {dimensions = array<i32: 0>} : vector<16x16xi32>
    %c12_i32 = arith.constant 12 : i32
    %28 = vector.broadcast %c12_i32 : i32 to vector<16x16xi32>
    %29 = arith.cmpi sle, %27, %28 : vector<16x16xi32>
    %cst_9 = arith.constant 0.000000e+00 : f32
    %cst_10 = arith.constant 0xFF800000 : f32
    %30 = vector.broadcast %cst_9 : f32 to vector<16x16xf32>
    %31 = vector.broadcast %cst_10 : f32 to vector<16x16xf32>
    %32 = arith.select %29, %30, %31 : vector<16x16xi1>, vector<16x16xf32>
    %33 = tpu.iota {dimensions = array<i32: 0>} : vector<16x16xi32>
    %c11_i32 = arith.constant 11 : i32
    %34 = vector.broadcast %c11_i32 : i32 to vector<16x16xi32>
    %35 = arith.cmpi sle, %33, %34 : vector<16x16xi32>
    %cst_11 = arith.constant 0.000000e+00 : f32
    %cst_12 = arith.constant 0xFF800000 : f32
    %36 = vector.broadcast %cst_11 : f32 to vector<16x16xf32>
    %37 = vector.broadcast %cst_12 : f32 to vector<16x16xf32>
    %38 = arith.select %35, %36, %37 : vector<16x16xi1>, vector<16x16xf32>
    %39 = tpu.concatenate %26, %32, %38 in 1 : vector<16x16xf32>, vector<16x16xf32>, vector<16x16xf32> -> vector<16x48xf32>
    %40 = vector.shape_cast %39 : vector<16x48xf32> to vector<1x16x48xf32>
    %41 = vector.broadcast %40 : vector<1x16x48xf32> to vector<4x16x48xf32>
    %42 = arith.addf %20, %41 : vector<4x16x48xf32>
    %cst_13 = arith.constant dense<0xFF800000> : vector<4x48xf32>
    %43 = vector.multi_reduction <maximumf>, %42, %cst_13 [1] : vector<4x16x48xf32> to vector<4x48xf32>
    %c0_14 = arith.constant 0 : index
    %c0_15 = arith.constant 0 : index
    %44 = vector.load %arg4[%c0_14, %c0_15] : memref<1x48xf32, #tpu.memory_space<vmem>>, vector<1x48xf32>
    %45 = vector.broadcast %44 : vector<1x48xf32> to vector<4x48xf32>
    %46 = arith.addf %43, %45 : vector<4x48xf32>
    %cst_16 = arith.constant 0.000000e+00 : f32
    %47 = vector.broadcast %cst_16 : f32 to vector<4x48xf32>
    %48 = arith.cmpf oge, %46, %47 : vector<4x48xf32>
    %cst_17 = arith.constant 0.00999999977 : f32
    %49 = vector.broadcast %cst_17 : f32 to vector<4x48xf32>
    %50 = arith.mulf %49, %46 : vector<4x48xf32>
    %51 = arith.select %48, %46, %50 : vector<4x48xi1>, vector<4x48xf32>
    %c0_18 = arith.constant 0 : index
    %c0_19 = arith.constant 0 : index
    %52 = vector.load %arg5[%c0_18, %c0_19] : memref<48x8xf32, #tpu.memory_space<vmem>>, vector<48x8xf32>
    %cst_20 = arith.constant dense<0.000000e+00> : vector<4x8xf32>
    %53 = tpu.matmul %51, %52, %cst_20 {dimension_numbers = #tpu.dot_dimension_numbers<[1], [0], [0], [1], [0, 0, 1, 1], [], []>} : vector<4x48xf32>, vector<48x8xf32>, vector<4x8xf32> -> vector<4x8xf32>
    %c0_21 = arith.constant 0 : index
    %c0_22 = arith.constant 0 : index
    %54 = vector.load %arg6[%c0_21, %c0_22] : memref<1x8xf32, #tpu.memory_space<vmem>>, vector<1x8xf32>
    %55 = vector.broadcast %54 : vector<1x8xf32> to vector<4x8xf32>
    %56 = arith.addf %53, %55 : vector<4x8xf32>
    %c0_23 = arith.constant 0 : index
    %c0_24 = arith.constant 0 : index
    %57 = vector.load %arg7[%c0_23, %c0_24] : memref<4x8xf32, #tpu.memory_space<vmem>>, vector<4x8xf32>
    tpu.vector_store %arg7[%c0_23, %c0_24], %56 {strides = array<i32>} : memref<4x8xf32, #tpu.memory_space<vmem>>, vector<4x8xf32>,
    return
  }
  func.func @transform_0(%arg0: i32) -> (i32, i32) {
    %c0_i32 = arith.constant 0 : i32
    %c0_i32_0 = arith.constant 0 : i32
    return %arg0, %c0_i32 : i32, i32
  }
  func.func @transform_1(%arg0: i32) -> (i32, i32) {
    %c0_i32 = arith.constant 0 : i32
    %c0_i32_0 = arith.constant 0 : i32
    %c0_i32_1 = arith.constant 0 : i32
    return %c0_i32, %c0_i32_0 : i32, i32
  }
  func.func @transform_2(%arg0: i32) -> (i32, i32) {
    %c0_i32 = arith.constant 0 : i32
    %c0_i32_0 = arith.constant 0 : i32
    %c0_i32_1 = arith.constant 0 : i32
    return %c0_i32, %c0_i32_0 : i32, i32
  }
  func.func @transform_3(%arg0: i32) -> (i32, i32) {
    %c0_i32 = arith.constant 0 : i32
    %c0_i32_0 = arith.constant 0 : i32
    %c0_i32_1 = arith.constant 0 : i32
    return %c0_i32, %c0_i32_0 : i32, i32
  }
  func.func @transform_4(%arg0: i32) -> (i32, i32) {
    %c0_i32 = arith.constant 0 : i32
    %c0_i32_0 = arith.constant 0 : i32
    %c0_i32_1 = arith.constant 0 : i32
    return %c0_i32, %c0_i32_0 : i32, i32
  }
  func.func @transform_5(%arg0: i32) -> (i32, i32) {
    %c0_i32 = arith.constant 0 : i32
    %c0_i32_0 = arith.constant 0 : i32
    %c0_i32_1 = arith.constant 0 : i32
    return %c0_i32, %c0_i32_0 : i32, i32
  }
  func.func @transform_6(%arg0: i32) -> (i32, i32) {
    %c0_i32 = arith.constant 0 : i32
    %c0_i32_0 = arith.constant 0 : i32
    return %arg0, %c0_i32 : i32, i32
  }
}

</mosaic_0001>

<llo_original>
// kernel: tpu_custom_call.1
$region0: #{tpu_custom_call.1}
  #allocation0 [shape = 'u32[]', space=smem, size = 0x4, offset = 0x4, fixed_abs, tag = 'smem constant byte address 0x4 - core index']
  #allocation1 [shape = 'u32[144,128]{1,0:T(1,128)}', space=vmem, size = 0x12000, scoped, tag = 'internal scratch']
  %s0 = inlined_call_operand.vmem [shape: s32[64,1], index: 0, kind: input, shape index: {}]
  %s1 = inlined_call_operand.vmem [shape: f32[50,32], index: 1, kind: input, shape index: {}]
  %s2 = inlined_call_operand.vmem [shape: f32[160,48], index: 2, kind: input, shape index: {}]
  %s3 = inlined_call_operand.vmem [shape: f32[1,48], index: 3, kind: input, shape index: {}]
  %s4 = inlined_call_operand.vmem [shape: f32[48,8], index: 4, kind: input, shape index: {}]
  %s5 = inlined_call_operand.vmem [shape: f32[1,8], index: 5, kind: input, shape index: {}]
  %s6 = inlined_call_operand.hbm [shape: f32[4,8], index: 6, kind: output, shape index: {}]
  %s7 = sld [smem:[#allocation0]]
  $region34: #{tpu_custom_call.1} parent=0
    _
  %s9 = ssub.s32 1, %s7
  %s10 = scalar_select 0, %s9, %s7
  $region1: #{tpu_custom_call.1} parent=0
    #allocation2 [shape = 'u8[2048]{0}', space=vmem, size = 0x800, scoped, tag = 'output window, operand 0, single buffered']
    #allocation3 [shape = 's32[1]{0}', space=sflag, size = 0x4, scoped, tag = 'scoped memory for tpu_custom_call.1']
    %11 = vsyncpa [#allocation3], 0
    // Predicated region
    $region2: #{tpu_custom_call.1} parent=1 // pred_check
      _
    $region3: #{tpu_custom_call.1} parent=1 // pred_check_branch
      %13 = sbr.rel (0) target = $region5
    $region4: #{tpu_custom_call.1} parent=1 // pred_region
      _
    $region5: #{tpu_custom_call.1} parent=1 // pred_fallthru
      _
    // Predicated region
    $region6: #{tpu_custom_call.1} parent=1 // pred_check
      _
    $region7: #{tpu_custom_call.1} parent=1 // pred_check_branch
      %15 = sbr.rel (0) target = $region9
    $region8: #{tpu_custom_call.1} parent=1 // pred_region
      _
    $region9: #{tpu_custom_call.1} parent=1 // pred_fallthru
      _
    // Predicated region
    $region10: #{tpu_custom_call.1} parent=1 // pred_check
      _
    $region11: #{tpu_custom_call.1} parent=1 // pred_check_branch
      %17 = sbr.rel (0) target = $region13
    $region12: #{tpu_custom_call.1} parent=1 // pred_region
      _
    $region13: #{tpu_custom_call.1} parent=1 // pred_fallthru
      _
    // Predicated region
    $region14: #{tpu_custom_call.1} parent=1 // pred_check
      _
    $region15: #{tpu_custom_call.1} parent=1 // pred_check_branch
      %19 = sbr.rel (0) target = $region17
    $region16: #{tpu_custom_call.1} parent=1 // pred_region
      _
    $region17: #{tpu_custom_call.1} parent=1 // pred_fallthru
      _
    // Predicated region
    $region18: #{tpu_custom_call.1} parent=1 // pred_check
      _
    $region19: #{tpu_custom_call.1} parent=1 // pred_check_branch
      %21 = sbr.rel (0) target = $region21
    $region20: #{tpu_custom_call.1} parent=1 // pred_region
      _
    $region21: #{tpu_custom_call.1} parent=1 // pred_fallthru
      _
    // Predicated region
    $region22: #{tpu_custom_call.1} parent=1 // pred_check
      _
    $region23: #{tpu_custom_call.1} parent=1 // pred_check_branch
      %23 = sbr.rel (0) target = $region25
    $region24: #{tpu_custom_call.1} parent=1 // pred_region
      _
    $region25: #{tpu_custom_call.1} parent=1 // pred_fallthru
      _
    %v24 = vld [vmem:[%s0] sm:$0xff]
    %v25 = vld [vmem:[%s0 + $0x8] sm:$0xff]
    %v26 = vld [vmem:[%s0 + $0x10] sm:$0xff]
    %v27 = vld [vmem:[%s0 + $0x18] sm:$0xff]
    %v28 = vld [vmem:[%s0 + $0x20] sm:$0xff]
    %v29 = vld [vmem:[%s0 + $0x28] sm:$0xff]
    %v30 = vld [vmem:[%s0 + $0x30] sm:$0xff]
    %v31 = vld [vmem:[%s0 + $0x38] sm:$0xff]
    %v32 = vlaneseq
    %v33 = vand.u32 %v32, 127
    %34 = vset.pattern.permute.xlu0 0
    %35 = vperm.xlu0 %34, %v24
    %v36 = vpop.permute.xlu0 %35
    %37 = vset.pattern.permute.xlu0 0
    %38 = vperm.xlu0 %37, %v25
    %v39 = vpop.permute.xlu0 %38
    %40 = vset.pattern.permute.xlu0 0
    %41 = vperm.xlu0 %40, %v26
    %v42 = vpop.permute.xlu0 %41
    %43 = vset.pattern.permute.xlu0 0
    %44 = vperm.xlu0 %43, %v27
    %v45 = vpop.permute.xlu0 %44
    %46 = vset.pattern.permute.xlu0 0
    %47 = vperm.xlu0 %46, %v28
    %v48 = vpop.permute.xlu0 %47
    %49 = vset.pattern.permute.xlu0 0
    %50 = vperm.xlu0 %49, %v29
    %v51 = vpop.permute.xlu0 %50
    %52 = vset.pattern.permute.xlu0 0
    %53 = vperm.xlu0 %52, %v30
    %v54 = vpop.permute.xlu0 %53
    %55 = vset.pattern.permute.xlu0 0
    %56 = vperm.xlu0 %55, %v31
    %v57 = vpop.permute.xlu0 %56
    %vm58 = vcmp.eq.s32.totalorder %v36, %v33
    %vm59 = vcmp.eq.s32.totalorder %v39, %v33
    %vm60 = vcmp.eq.s32.totalorder %v42, %v33
    %vm61 = vcmp.eq.s32.totalorder %v45, %v33
    %vm62 = vcmp.eq.s32.totalorder %v48, %v33
    %vm63 = vcmp.eq.s32.totalorder %v51, %v33
    %vm64 = vcmp.eq.s32.totalorder %v54, %v33
    %vm65 = vcmp.eq.s32.totalorder %v57, %v33
    %v66 = vsel %vm58, 1, 0
    %v67 = vsel %vm59, 1, 0
    %v68 = vsel %vm60, 1, 0
    %v69 = vsel %vm61, 1, 0
    %v70 = vsel %vm62, 1, 0
    %v71 = vsel %vm63, 1, 0
    %v72 = vsel %vm64, 1, 0
    %v73 = vsel %vm65, 1, 0
    %v74 = vcvt.s32.f32 %v66
    %v75 = vcvt.s32.f32 %v67
    %v76 = vcvt.s32.f32 %v68
    %v77 = vcvt.s32.f32 %v69
    %v78 = vcvt.s32.f32 %v70
    %v79 = vcvt.s32.f32 %v71
    %v80 = vcvt.s32.f32 %v72
    %v81 = vcvt.s32.f32 %v73
    %v82 = vld [vmem:[%s1] sm:$0xff]
    %v83 = vld [vmem:[%s1 + $0x8] sm:$0xff]
    %v84 = vld [vmem:[%s1 + $0x10] sm:$0xff]
    %v85 = vld [vmem:[%s1 + $0x18] sm:$0xff]
    %v86 = vld [vmem:[%s1 + $0x20] sm:$0xff]
    %v87 = vld [vmem:[%s1 + $0x28] sm:$0xff]
    %v88 = vld [vmem:[%s1 + $0x30] sm:$0x3]
    %vm89 = vcmask 408576
    %v91 = vsel %vm89, %v74, 0
    %v94 = vsel %vm89, %v75, 0
    %v97 = vsel %vm89, %v76, 0
    %v100 = vsel %vm89, %v77, 0
    %v103 = vsel %vm89, %v78, 0
    %v106 = vsel %vm89, %v79, 0
    %v109 = vsel %vm89, %v80, 0
    %v112 = vsel %vm89, %v81, 0
    %vm114 = vcmask 1041408
    %v116 = vsel %vm114, %v88, 0
    %118 = vmatprep.subr.mxu0 0.0
    %119 = vmatpush1.msra.mxu0 %v82
    %120 = vmatprep.subr.mxu0 0.0
    %121 = vmatpush1.msra.mxu0 %v83
    %122 = vmatprep.subr.mxu0 0.0
    %123 = vmatpush1.msra.mxu0 %v84
    %124 = vmatprep.subr.mxu0 0.0
    %125 = vmatpush1.msra.mxu0 %v85
    %126 = vmatprep.subr.mxu0 0.0
    %127 = vmatpush1.msra.mxu0 %v86
    %128 = vmatprep.subr.mxu0 0.0
    %129 = vmatpush1.msra.mxu0 %v87
    %130 = vmatprep.subr.mxu0 0.0
    %131 = vmatpush1.msra.mxu0 %v116
    %132 = vmatprep.subr.mxu0 0.0
    %133 = vmatpush1.msra.mxu0 0.0
    %134 = vmatprep.subr.mxu0 0.0
    %135 = vmatpush1.msra.mxu0 0.0
    %136 = vmatprep.subr.mxu0 0.0
    %137 = vmatpush1.msra.mxu0 0.0
    %138 = vmatprep.subr.mxu0 0.0
    %139 = vmatpush1.msra.mxu0 0.0
    %140 = vmatprep.subr.mxu0 0.0
    %141 = vmatpush1.msra.mxu0 0.0
    %142 = vmatprep.subr.mxu0 0.0
    %143 = vmatpush1.msra.mxu0 0.0
    %144 = vmatprep.subr.mxu0 0.0
    %145 = vmatpush1.msra.mxu0 0.0
    %146 = vmatprep.subr.mxu0 0.0
    %147 = vmatpush1.msra.mxu0 0.0
    %148 = vmatprep.subr.mxu0 0.0
    %149 = vmatpush1.msra.mxu0 0.0
    %150 = vmatprep.subr.mxu0 0.0
    %151 = vmatpush1.msra.mxu0 0.0
    %152 = vmatprep.subr.mxu0 0.0
    %153 = vmatpush1.msra.mxu0 0.0
    %154 = vmatprep.subr.mxu0 0.0
    %155 = vmatpush1.msra.mxu0 0.0
    %156 = vmatprep.subr.mxu0 0.0
    %157 = vmatpush1.msra.mxu0 0.0
    %158 = vmatprep.subr.mxu0 0.0
    %159 = vmatpush1.msra.mxu0 0.0
    %160 = vmatprep.subr.mxu0 0.0
    %161 = vmatpush1.msra.mxu0 0.0
    %162 = vmatprep.subr.mxu0 0.0
    %163 = vmatpush1.msra.mxu0 0.0
    %164 = vmatprep.subr.mxu0 0.0
    %165 = vmatpush1.msra.mxu0 0.0
    %166 = vmatprep.subr.mxu0 0.0
    %167 = vmatpush1.msra.mxu0 0.0
    %168 = vmatprep.subr.mxu0 0.0
    %169 = vmatpush1.msra.mxu0 0.0
    %170 = vmatprep.subr.mxu0 0.0
    %171 = vmatpush1.msra.mxu0 0.0
    %172 = vmatprep.subr.mxu0 0.0
    %173 = vmatpush1.msra.mxu0 0.0
    %174 = vmatprep.subr.mxu0 0.0
    %175 = vmatpush1.msra.mxu0 0.0
    %176 = vmatprep.subr.mxu0 0.0
    %177 = vmatpush1.msra.mxu0 0.0
    %178 = vmatprep.subr.mxu0 0.0
    %179 = vmatpush1.msra.mxu0 0.0
    %180 = vmatprep.subr.mxu0 0.0
    %181 = vmatpush1.msra.mxu0 0.0
    %182 = vmatprep.mubr.f32.mxu0 0.0
    %183 = vmatmul.mubr.f32.gmra.mrb[0].mxu0 %v91
    %v184 = vpop.f32.mrb[0].mxu0
    %v185 = vadd.f32 0.0, %v184
    %v186 = vpop.f32.mrb[0].mxu0
    %187 = vmatprep.mubr.f32.mxu0 0.0
    %188 = vmatmul.mubr.f32.gmra.mrb[0].mxu0 %v94
    %v189 = vpop.f32.mrb[0].mxu0
    %v190 = vadd.f32 0.0, %v189
    %v191 = vpop.f32.mrb[0].mxu0
    %192 = vmatprep.mubr.f32.mxu0 0.0
    %193 = vmatmul.mubr.f32.gmra.mrb[0].mxu0 %v97
    %v194 = vpop.f32.mrb[0].mxu0
    %v195 = vadd.f32 0.0, %v194
    %v196 = vpop.f32.mrb[0].mxu0
    %197 = vmatprep.mubr.f32.mxu0 0.0
    %198 = vmatmul.mubr.f32.gmra.mrb[0].mxu0 %v100
    %v199 = vpop.f32.mrb[0].mxu0
    %v200 = vadd.f32 0.0, %v199
    %v201 = vpop.f32.mrb[0].mxu0
    %202 = vmatprep.mubr.f32.mxu0 0.0
    %203 = vmatmul.mubr.f32.gmra.mrb[0].mxu0 %v103
    %v204 = vpop.f32.mrb[0].mxu0
    %v205 = vadd.f32 0.0, %v204
    %v206 = vpop.f32.mrb[0].mxu0
    %207 = vmatprep.mubr.f32.mxu0 0.0
    %208 = vmatmul.mubr.f32.gmra.mrb[0].mxu0 %v106
    %v209 = vpop.f32.mrb[0].mxu0
    %v210 = vadd.f32 0.0, %v209
    %v211 = vpop.f32.mrb[0].mxu0
    %212 = vmatprep.mubr.f32.mxu0 0.0
    %213 = vmatmul.mubr.f32.gmra.mrb[0].mxu0 %v109
    %v214 = vpop.f32.mrb[0].mxu0
    %v215 = vadd.f32 0.0, %v214
    %v216 = vpop.f32.mrb[0].mxu0
    %217 = vmatprep.mubr.f32.mxu0 0.0
    %218 = vmatmul.mubr.f32.gmra.mrb[0].mxu0 %v112
    %v219 = vpop.f32.mrb[0].mxu0
    %v220 = vadd.f32 0.0, %v219
    %v221 = vpop.f32.mrb[0].mxu0
    %222 = vdwg.mxu0
    %vm232 = vcmask 1046528
    %v233 = vrot.slane %v185, 1
    %v234 = vrot.slane %v190, 1
    %v235 = vsel %vm232, %v233, %v234
    %v236 = vrot.slane 0.0, 1
    %v237 = vsel %vm232, %v234, %v236
    %v238 = vrot.slane %v195, 1
    %v239 = vrot.slane %v200, 1
    %v240 = vsel %vm232, %v238, %v239
    %v241 = vsel %vm232, %v239, %v236
    %v242 = vrot.slane %v205, 1
    %v243 = vrot.slane %v210, 1
    %v244 = vsel %vm232, %v242, %v243
    %v245 = vsel %vm232, %v243, %v236
    %v246 = vrot.slane %v215, 1
    %v247 = vrot.slane %v220, 1
    %v248 = vsel %vm232, %v246, %v247
    %v249 = vsel %vm232, %v247, %v236
    %250 = vrot.lane.b32.xlu0 %v235, 32
    %v251 = vpop.permute.xlu0 %250
    %252 = vrot.lane.b32.xlu0 %v237, 32
    %v253 = vpop.permute.xlu0 %252
    %254 = vrot.lane.b32.xlu0 %v240, 32
    %v255 = vpop.permute.xlu0 %254
    %256 = vrot.lane.b32.xlu0 %v241, 32
    %v257 = vpop.permute.xlu0 %256
    %258 = vrot.lane.b32.xlu0 %v244, 32
    %v259 = vpop.permute.xlu0 %258
    %260 = vrot.lane.b32.xlu0 %v245, 32
    %v261 = vpop.permute.xlu0 %260
    %262 = vrot.lane.b32.xlu0 %v248, 32
    %v263 = vpop.permute.xlu0 %262
    %264 = vrot.lane.b32.xlu0 %v249, 32
    %v265 = vpop.permute.xlu0 %264
    %vm274 = vcmask 1045504
    %v275 = vrot.slane %v185, 2
    %v276 = vrot.slane %v190, 2
    %v277 = vsel %vm274, %v275, %v276
    %v278 = vrot.slane 0.0, 2
    %v279 = vsel %vm274, %v276, %v278
    %v280 = vrot.slane %v195, 2
    %v281 = vrot.slane %v200, 2
    %v282 = vsel %vm274, %v280, %v281
    %v283 = vsel %vm274, %v281, %v278
    %v284 = vrot.slane %v205, 2
    %v285 = vrot.slane %v210, 2
    %v286 = vsel %vm274, %v284, %v285
    %v287 = vsel %vm274, %v285, %v278
    %v288 = vrot.slane %v215, 2
    %v289 = vrot.slane %v220, 2
    %v290 = vsel %vm274, %v288, %v289
    %v291 = vsel %vm274, %v289, %v278
    %292 = vrot.lane.b32.xlu0 %v277, 64
    %v293 = vpop.permute.xlu0 %292
    %294 = vrot.lane.b32.xlu0 %v279, 64
    %v295 = vpop.permute.xlu0 %294
    %296 = vrot.lane.b32.xlu0 %v282, 64
    %v297 = vpop.permute.xlu0 %296
    %298 = vrot.lane.b32.xlu0 %v283, 64
    %v299 = vpop.permute.xlu0 %298
    %300 = vrot.lane.b32.xlu0 %v286, 64
    %v301 = vpop.permute.xlu0 %300
    %302 = vrot.lane.b32.xlu0 %v287, 64
    %v303 = vpop.permute.xlu0 %302
    %304 = vrot.lane.b32.xlu0 %v290, 64
    %v305 = vpop.permute.xlu0 %304
    %306 = vrot.lane.b32.xlu0 %v291, 64
    %v307 = vpop.permute.xlu0 %306
    %vm316 = vcmask 1044480
    %v317 = vrot.slane %v185, 3
    %v318 = vrot.slane %v190, 3
    %v319 = vsel %vm316, %v317, %v318
    %v320 = vrot.slane 0.0, 3
    %v321 = vsel %vm316, %v318, %v320
    %v322 = vrot.slane %v195, 3
    %v323 = vrot.slane %v200, 3
    %v324 = vsel %vm316, %v322, %v323
    %v325 = vsel %vm316, %v323, %v320
    %v326 = vrot.slane %v205, 3
    %v327 = vrot.slane %v210, 3
    %v328 = vsel %vm316, %v326, %v327
    %v329 = vsel %vm316, %v327, %v320
    %v330 = vrot.slane %v215, 3
    %v331 = vrot.slane %v220, 3
    %v332 = vsel %vm316, %v330, %v331
    %v333 = vsel %vm316, %v331, %v320
    %334 = vrot.lane.b32.xlu0 %v319, 96
    %v335 = vpop.permute.xlu0 %334
    %336 = vrot.lane.b32.xlu0 %v321, 96
    %v337 = vpop.permute.xlu0 %336
    %338 = vrot.lane.b32.xlu0 %v324, 96
    %v339 = vpop.permute.xlu0 %338
    %340 = vrot.lane.b32.xlu0 %v325, 96
    %v341 = vpop.permute.xlu0 %340
    %342 = vrot.lane.b32.xlu0 %v328, 96
    %v343 = vpop.permute.xlu0 %342
    %344 = vrot.lane.b32.xlu0 %v329, 96
    %v345 = vpop.permute.xlu0 %344
    %346 = vrot.lane.b32.xlu0 %v332, 96
    %v347 = vpop.permute.xlu0 %346
    %348 = vrot.lane.b32.xlu0 %v333, 96
    %v349 = vpop.permute.xlu0 %348
    %vm358 = vcmask 1043456
    %v359 = vrot.slane %v185, 4
    %v360 = vrot.slane %v190, 4
    %v361 = vsel %vm358, %v359, %v360
    %v362 = vrot.slane 0.0, 4
    %v363 = vsel %vm358, %v360, %v362
    %v364 = vrot.slane %v195, 4
    %v365 = vrot.slane %v200, 4
    %v366 = vsel %vm358, %v364, %v365
    %v367 = vsel %vm358, %v365, %v362
    %v368 = vrot.slane %v205, 4
    %v369 = vrot.slane %v210, 4
    %v370 = vsel %vm358, %v368, %v369
    %v371 = vsel %vm358, %v369, %v362
    %v372 = vrot.slane %v215, 4
    %v373 = vrot.slane %v220, 4
    %v374 = vsel %vm358, %v372, %v373
    %v375 = vsel %vm358, %v373, %v362
    %vm376 = vcmask 261120
    %v377 = vsel %vm376, %v185, %v251
    %v378 = vsel %vm376, %v190, %v253
    %v379 = vsel %vm376, %v195, %v255
    %v380 = vsel %vm376, %v200, %v257
    %v381 = vsel %vm376, %v205, %v259
    %v382 = vsel %vm376, %v210, %v261
    %v383 = vsel %vm376, %v215, %v263
    %v384 = vsel %vm376, %v220, %v265
    %vm385 = vcmask 523264
    %v386 = vsel %vm385, %v377, %v293
    %v387 = vsel %vm385, %v378, %v295
    %v388 = vsel %vm385, %v379, %v297
    %v389 = vsel %vm385, %v380, %v299
    %v390 = vsel %vm385, %v381, %v301
    %v391 = vsel %vm385, %v382, %v303
    %v392 = vsel %vm385, %v383, %v305
    %v393 = vsel %vm385, %v384, %v307
    %vm394 = vcmask 785408
    %v395 = vsel %vm394, %v386, %v335
    %v396 = vsel %vm394, %v387, %v337
    %v397 = vsel %vm394, %v388, %v339
    %v398 = vsel %vm394, %v389, %v341
    %v399 = vsel %vm394, %v390, %v343
    %v400 = vsel %vm394, %v391, %v345
    %v401 = vsel %vm394, %v392, %v347
    %v402 = vsel %vm394, %v393, %v349
    %v403 = vld [vmem:[%s2] sm:$0xff]
    %v404 = vld [vmem:[%s2 + $0x8] sm:$0xff]
    %v405 = vld [vmem:[%s2 + $0x10] sm:$0xff]
    %v406 = vld [vmem:[%s2 + $0x18] sm:$0xff]
    %v407 = vld [vmem:[%s2 + $0x20] sm:$0xff]
    %v408 = vld [vmem:[%s2 + $0x28] sm:$0xff]
    %v409 = vld [vmem:[%s2 + $0x30] sm:$0xff]
    %v410 = vld [vmem:[%s2 + $0x38] sm:$0xff]
    %v411 = vld [vmem:[%s2 + $0x40] sm:$0xff]
    %v412 = vld [vmem:[%s2 + $0x48] sm:$0xff]
    %v413 = vld [vmem:[%s2 + $0x50] sm:$0xff]
    %v414 = vld [vmem:[%s2 + $0x58] sm:$0xff]
    %v415 = vld [vmem:[%s2 + $0x60] sm:$0xff]
    %v416 = vld [vmem:[%s2 + $0x68] sm:$0xff]
    %v417 = vld [vmem:[%s2 + $0x70] sm:$0xff]
    %v418 = vld [vmem:[%s2 + $0x78] sm:$0xff]
    %v419 = vld [vmem:[%s2 + $0x80] sm:$0xff]
    %v420 = vld [vmem:[%s2 + $0x88] sm:$0xff]
    %v421 = vld [vmem:[%s2 + $0x90] sm:$0xff]
    %v422 = vld [vmem:[%s2 + $0x98] sm:$0xff]
    %v423 = vsel %vm376, %v361, 0
    %v425 = vsel %vm376, %v363, 0
    %v427 = vsel %vm376, %v366, 0
    %v429 = vsel %vm376, %v367, 0
    %v431 = vsel %vm376, %v370, 0
    %v433 = vsel %vm376, %v371, 0
    %v435 = vsel %vm376, %v374, 0
    %v437 = vsel %vm376, %v375, 0
    %439 = vmatprep.subr.mxu0 0.0
    %440 = vmatpush1.msra.mxu0 %v403
    %441 = vmatprep.subr.mxu0 0.0
    %442 = vmatpush1.msra.mxu0 %v404
    %443 = vmatprep.subr.mxu0 0.0
    %444 = vmatpush1.msra.mxu0 %v405
    %445 = vmatprep.subr.mxu0 0.0
    %446 = vmatpush1.msra.mxu0 %v406
    %447 = vmatprep.subr.mxu0 0.0
    %448 = vmatpush1.msra.mxu0 %v407
    %449 = vmatprep.subr.mxu0 0.0
    %450 = vmatpush1.msra.mxu0 %v408
    %451 = vmatprep.subr.mxu0 0.0
    %452 = vmatpush1.msra.mxu0 %v409
    %453 = vmatprep.subr.mxu0 0.0
    %454 = vmatpush1.msra.mxu0 %v410
    %455 = vmatprep.subr.mxu0 0.0
    %456 = vmatpush1.msra.mxu0 %v411
    %457 = vmatprep.subr.mxu0 0.0
    %458 = vmatpush1.msra.mxu0 %v412
    %459 = vmatprep.subr.mxu0 0.0
    %460 = vmatpush1.msra.mxu0 %v413
    %461 = vmatprep.subr.mxu0 0.0
    %462 = vmatpush1.msra.mxu0 %v414
    %463 = vmatprep.subr.mxu0 0.0
    %464 = vmatpush1.msra.mxu0 %v415
    %465 = vmatprep.subr.mxu0 0.0
    %466 = vmatpush1.msra.mxu0 %v416
    %467 = vmatprep.subr.mxu0 0.0
    %468 = vmatpush1.msra.mxu0 %v417
    %469 = vmatprep.subr.mxu0 0.0
    %470 = vmatpush1.msra.mxu0 %v418
    %471 = vmatprep.subr.mxu0 0.0
    %472 = vmatpush1.msra.mxu0 %v419
    %473 = vmatprep.subr.mxu0 0.0
    %474 = vmatpush1.msra.mxu0 %v420
    %475 = vmatprep.subr.mxu0 0.0
    %476 = vmatpush1.msra.mxu0 %v421
    %477 = vmatprep.subr.mxu0 0.0
    %478 = vmatpush1.msra.mxu0 %v422
    %479 = vmatprep.subr.mxu0 0.0
    %480 = vmatpush1.msra.mxu0 0.0
    %481 = vmatprep.subr.mxu0 0.0
    %482 = vmatpush1.msra.mxu0 0.0
    %483 = vmatprep.subr.mxu0 0.0
    %484 = vmatpush1.msra.mxu0 0.0
    %485 = vmatprep.subr.mxu0 0.0
    %486 = vmatpush1.msra.mxu0 0.0
    %487 = vmatprep.subr.mxu0 0.0
    %488 = vmatpush1.msra.mxu0 0.0
    %489 = vmatprep.subr.mxu0 0.0
    %490 = vmatpush1.msra.mxu0 0.0
    %491 = vmatprep.subr.mxu0 0.0
    %492 = vmatpush1.msra.mxu0 0.0
    %493 = vmatprep.subr.mxu0 0.0
    %494 = vmatpush1.msra.mxu0 0.0
    %495 = vmatprep.subr.mxu0 0.0
    %496 = vmatpush1.msra.mxu0 0.0
    %497 = vmatprep.subr.mxu0 0.0
    %498 = vmatpush1.msra.mxu0 0.0
    %499 = vmatprep.subr.mxu0 0.0
    %500 = vmatpush1.msra.mxu0 0.0
    %501 = vmatprep.subr.mxu0 0.0
    %502 = vmatpush1.msra.mxu0 0.0
    %503 = vmatprep.mubr.f32.mxu0 %v423
    %504 = vmatmul.mubr.f32.gmra.mrb[0].mxu0 %v395
    %v505 = vpop.f32.mrb[0].mxu0
    %v506 = vadd.f32 0.0, %v505
    %v507 = vpop.f32.mrb[0].mxu0
    %508 = vmatprep.mubr.f32.mxu0 %v425
    %509 = vmatmul.mubr.f32.gmra.mrb[0].mxu0 %v396
    %v510 = vpop.f32.mrb[0].mxu0
    %v511 = vadd.f32 0.0, %v510
    %v512 = vpop.f32.mrb[0].mxu0
    %513 = vmatprep.mubr.f32.mxu0 %v427
    %514 = vmatmul.mubr.f32.gmra.mrb[0].mxu0 %v397
    %v515 = vpop.f32.mrb[0].mxu0
    %v516 = vadd.f32 0.0, %v515
    %v517 = vpop.f32.mrb[0].mxu0
    %518 = vmatprep.mubr.f32.mxu0 %v429
    %519 = vmatmul.mubr.f32.gmra.mrb[0].mxu0 %v398
    %v520 = vpop.f32.mrb[0].mxu0
    %v521 = vadd.f32 0.0, %v520
    %v522 = vpop.f32.mrb[0].mxu0
    %523 = vmatprep.mubr.f32.mxu0 %v431
    %524 = vmatmul.mubr.f32.gmra.mrb[0].mxu0 %v399
    %v525 = vpop.f32.mrb[0].mxu0
    %v526 = vadd.f32 0.0, %v525
    %v527 = vpop.f32.mrb[0].mxu0
    %528 = vmatprep.mubr.f32.mxu0 %v433
    %529 = vmatmul.mubr.f32.gmra.mrb[0].mxu0 %v400
    %v530 = vpop.f32.mrb[0].mxu0
    %v531 = vadd.f32 0.0, %v530
    %v532 = vpop.f32.mrb[0].mxu0
    %533 = vmatprep.mubr.f32.mxu0 %v435
    %534 = vmatmul.mubr.f32.gmra.mrb[0].mxu0 %v401
    %v535 = vpop.f32.mrb[0].mxu0
    %v536 = vadd.f32 0.0, %v535
    %v537 = vpop.f32.mrb[0].mxu0
    %538 = vmatprep.mubr.f32.mxu0 %v437
    %539 = vmatmul.mubr.f32.gmra.mrb[0].mxu0 %v402
    %v540 = vpop.f32.mrb[0].mxu0
    %v541 = vadd.f32 0.0, %v540
    %v542 = vpop.f32.mrb[0].mxu0
    %543 = vdwg.mxu0
    %v544 = vlaneseq
    %v545 = vshrl.u32 %v544, 7
    %v546 = vadd.s32 %v545, 8
    %vm547 = vcmp.le.s32.totalorder %v545, 13
    %vm548 = vcmp.le.s32.totalorder %v546, 13
    %v549 = vsel %vm547, 0.0, -inf
    %v550 = vsel %vm548, 0.0, -inf
    %vm551 = vcmp.le.s32.totalorder %v545, 12
    %vm552 = vcmp.le.s32.totalorder %v546, 12
    %v553 = vsel %vm551, 0.0, -inf
    %v554 = vsel %vm552, 0.0, -inf
    %vm555 = vcmp.le.s32.totalorder %v545, 11
    %vm556 = vcmp.le.s32.totalorder %v546, 11
    %v557 = vsel %vm555, 0.0, -inf
    %v558 = vsel %vm556, 0.0, -inf
    %vm559 = vcmask 130048
    %v560 = vsel %vm559, %v549, %v553
    %v561 = vsel %vm559, %v550, %v554
    %v562 = vsel %vm376, %v560, %v557
    %v563 = vsel %vm376, %v561, %v558
    %v564 = vadd.f32 %v506, %v562
    %v565 = vadd.f32 %v511, %v563
    %v566 = vadd.f32 %v516, %v562
    %v567 = vadd.f32 %v521, %v563
    %v568 = vadd.f32 %v526, %v562
    %v569 = vadd.f32 %v531, %v563
    %v570 = vadd.f32 %v536, %v562
    %v571 = vadd.f32 %v541, %v563
    %vm572 = vcmask 392192
    %v573 = vsel %vm572, %v564, -inf
    %v574 = vsel %vm572, %v565, -inf
    %v575 = vmax.f32 %v573, %v574
    %v576 = vrot.slane %v575, 4
    %v577 = vmax.f32 %v575, %v576
    %v578 = vrot.slane %v577, 2
    %v579 = vmax.f32 %v577, %v578
    %v580 = vrot.slane %v579, 1
    %v581 = vmax.f32 %v579, %v580
    %v582 = vsel %vm572, %v566, -inf
    %v583 = vsel %vm572, %v567, -inf
    %v584 = vmax.f32 %v582, %v583
    %v585 = vrot.slane %v584, 4
    %v586 = vmax.f32 %v584, %v585
    %v587 = vrot.slane %v586, 2
    %v588 = vmax.f32 %v586, %v587
    %v589 = vrot.slane %v588, 1
    %v590 = vmax.f32 %v588, %v589
    %v591 = vsel %vm572, %v568, -inf
    %v592 = vsel %vm572, %v569, -inf
    %v593 = vmax.f32 %v591, %v592
    %v594 = vrot.slane %v593, 4
    %v595 = vmax.f32 %v593, %v594
    %v596 = vrot.slane %v595, 2
    %v597 = vmax.f32 %v595, %v596
    %v598 = vrot.slane %v597, 1
    %v599 = vmax.f32 %v597, %v598
    %v600 = vsel %vm572, %v570, -inf
    %v601 = vsel %vm572, %v571, -inf
    %v602 = vmax.f32 %v600, %v601
    %v603 = vrot.slane %v602, 4
    %v604 = vmax.f32 %v602, %v603
    %v605 = vrot.slane %v604, 2
    %v606 = vmax.f32 %v604, %v605
    %v607 = vrot.slane %v606, 1
    %v608 = vmax.f32 %v606, %v607
    %v609 = vld [vmem:[%s3] sm:$0x1]
    %v611 = vlaneseq
    %v612 = vshrl.u32 %v611, 7
    %v613 = vsub.s32 0, %v612
    %v614 = vrot.slane %v609, %v613
    %v616 = vadd.f32 %v581, %v614
    %v617 = vadd.f32 %v590, %v614
    %v618 = vadd.f32 %v599, %v614
    %v619 = vadd.f32 %v608, %v614
    %vm620 = vcmp.ge.f32.partialorder %v616, 0.0
    %vm621 = vcmp.ge.f32.partialorder %v617, 0.0
    %vm622 = vcmp.ge.f32.partialorder %v618, 0.0
    %vm623 = vcmp.ge.f32.partialorder %v619, 0.0
    %v624 = vmul.f32 %v616, 0.01
    %v625 = vmul.f32 %v617, 0.01
    %v626 = vmul.f32 %v618, 0.01
    %v627 = vmul.f32 %v619, 0.01
    %v628 = vsel %vm620, %v616, %v624
    %v629 = vsel %vm621, %v617, %v625
    %v630 = vsel %vm622, %v618, %v626
    %v631 = vsel %vm623, %v619, %v627
    %v632 = vld [vmem:[%s4] sm:$0xff]
    %v633 = vld [vmem:[%s4 + $0x8] sm:$0xff]
    %v634 = vld [vmem:[%s4 + $0x10] sm:$0xff]
    %v635 = vld [vmem:[%s4 + $0x18] sm:$0xff]
    %v636 = vld [vmem:[%s4 + $0x20] sm:$0xff]
    %v637 = vld [vmem:[%s4 + $0x28] sm:$0xff]
    %v638 = vld [vmem:[%s5] sm:$0x1]
    %v640 = vlaneseq
    %v641 = vshrl.u32 %v640, 7
    %v642 = vsub.s32 0, %v641
    %v643 = vrot.slane %v638, %v642
    %v649 = vrot.slane %v629, 7
    %vm650 = vcmask 1041409
    %v651 = vsel %vm650, %v649, %v628
    %v652 = vrot.slane %v630, 6
    %vm653 = vcmask 1042434
    %v654 = vsel %vm653, %v652, %v651
    %v655 = vrot.slane %v631, 5
    %vm656 = vcmask 1043459
    %v657 = vsel %vm656, %v655, %v654
    %v658 = vsel %vm572, %v657, 0
    %660 = vmatprep.subr.mxu0 0.0
    %661 = vmatpush1.msra.mxu0 %v632
    %662 = vmatprep.subr.mxu0 0.0
    %663 = vmatpush1.msra.mxu0 %v633
    %664 = vmatprep.subr.mxu0 0.0
    %665 = vmatpush1.msra.mxu0 %v634
    %666 = vmatprep.subr.mxu0 0.0
    %667 = vmatpush1.msra.mxu0 %v635
    %668 = vmatprep.subr.mxu0 0.0
    %669 = vmatpush1.msra.mxu0 %v636
    %670 = vmatprep.subr.mxu0 0.0
    %671 = vmatpush1.msra.mxu0 %v637
    %672 = vmatprep.subr.mxu0 0.0
    %673 = vmatpush1.msra.mxu0 0.0
    %674 = vmatprep.subr.mxu0 0.0
    %675 = vmatpush1.msra.mxu0 0.0
    %676 = vmatprep.subr.mxu0 0.0
    %677 = vmatpush1.msra.mxu0 0.0
    %678 = vmatprep.subr.mxu0 0.0
    %679 = vmatpush1.msra.mxu0 0.0
    %680 = vmatprep.subr.mxu0 0.0
    %681 = vmatpush1.msra.mxu0 0.0
    %682 = vmatprep.subr.mxu0 0.0
    %683 = vmatpush1.msra.mxu0 0.0
    %684 = vmatprep.subr.mxu0 0.0
    %685 = vmatpush1.msra.mxu0 0.0
    %686 = vmatprep.subr.mxu0 0.0
    %687 = vmatpush1.msra.mxu0 0.0
    %688 = vmatprep.subr.mxu0 0.0
    %689 = vmatpush1.msra.mxu0 0.0
    %690 = vmatprep.subr.mxu0 0.0
    %691 = vmatpush1.msra.mxu0 0.0
    %692 = vmatprep.subr.mxu0 0.0
    %693 = vmatpush1.msra.mxu0 0.0
    %694 = vmatprep.subr.mxu0 0.0
    %695 = vmatpush1.msra.mxu0 0.0
    %696 = vmatprep.subr.mxu0 0.0
    %697 = vmatpush1.msra.mxu0 0.0
    %698 = vmatprep.subr.mxu0 0.0
    %699 = vmatpush1.msra.mxu0 0.0
    %700 = vmatprep.subr.mxu0 0.0
    %701 = vmatpush1.msra.mxu0 0.0
    %702 = vmatprep.subr.mxu0 0.0
    %703 = vmatpush1.msra.mxu0 0.0
    %704 = vmatprep.subr.mxu0 0.0
    %705 = vmatpush1.msra.mxu0 0.0
    %706 = vmatprep.subr.mxu0 0.0
    %707 = vmatpush1.msra.mxu0 0.0
    %708 = vmatprep.subr.mxu0 0.0
    %709 = vmatpush1.msra.mxu0 0.0
    %710 = vmatprep.subr.mxu0 0.0
    %711 = vmatpush1.msra.mxu0 0.0
    %712 = vmatprep.subr.mxu0 0.0
    %713 = vmatpush1.msra.mxu0 0.0
    %714 = vmatprep.subr.mxu0 0.0
    %715 = vmatpush1.msra.mxu0 0.0
    %716 = vmatprep.subr.mxu0 0.0
    %717 = vmatpush1.msra.mxu0 0.0
    %718 = vmatprep.subr.mxu0 0.0
    %719 = vmatpush1.msra.mxu0 0.0
    %720 = vmatprep.subr.mxu0 0.0
    %721 = vmatpush1.msra.mxu0 0.0
    %722 = vmatprep.subr.mxu0 0.0
    %723 = vmatpush1.msra.mxu0 0.0
    %724 = vmatprep.mubr.f32.mxu0 0.0
    %725 = vmatmul.mubr.f32.gmra.mrb[0].mxu0 %v658
    %v726 = vpop.f32.mrb[0].mxu0
    %v727 = vadd.f32 %v643, %v726
    %v728 = vpop.f32.mrb[0].mxu0
    %729 = vdwg.mxu0
    %vm730 = vcmask 60416
    %731 = vst.msk [vmem:[#allocation2] sm:$0xf] %vm730, %v727
    // Predicated region
    $region26: #{tpu_custom_call.1} parent=1 // pred_check
      _
    $region27: #{tpu_custom_call.1} parent=1 // pred_check_branch
      %733 = sbr.rel (0) target = $region29
    $region28: #{tpu_custom_call.1} parent=1 // pred_region
      %s735 = ssub.s32 64, 64
      %736 = vsyncadd [#allocation3], %s735
      %s738 = sshll.u32 [#allocation2], 4
      %s739 = int_to_ptr.vmem [resolvable:$true] %s738
      %741 = dma.vmem_to_hbm [thread:$0]  %s739, 64, %s6, [#allocation3]
    $region29: #{tpu_custom_call.1} parent=1 // pred_fallthru
      _
    // Predicated region
    $region30: #{tpu_custom_call.1} parent=1 // pred_check
      _
    $region31: #{tpu_custom_call.1} parent=1 // pred_check_branch
      %743 = sbr.rel (0) target = $region33
    $region32: #{tpu_custom_call.1} parent=1 // pred_region
      %744 = dma.done [#allocation3], 64
    $region33: #{tpu_custom_call.1} parent=1 // pred_fallthru
      _
    %745 = vsyncpa [#allocation3], 1

</llo_original>
